<compile_context>
chip_gen: v6e
topology: v6e:2x2x1
jax: 0.10.0
libtpu: 0.0.40
codegen_flags: <defaults>
</compile_context>

<pallas_src>
import functools

import jax
import jax.numpy as jnp
from jax.experimental import pallas as pl
from jax.experimental.pallas import tpu as pltpu

# Concat order in the PyTorch forward: (D, E*0, F, G*0, H*0, I).
_ACTIVE_BLOCKS = (0, 2, 5)            # D, F, I blocks within the 384-wide concat
_HID = 64                             # per-branch hidden width
_KACT = _HID * len(_ACTIVE_BLOCKS)    # 192 active fc1 input features
_KAUG = 8                             # x_aug width  [D, F, I, 1, 0, 0, 0, 0]
_XALL = 256                           # padded x_all width (192 + ones col + pad)
_H1W = 128                            # padded h1 width    (64  + ones col + pad)

# Row offsets of the three weight blocks inside the packed slab (all 8-aligned).
_R0 = 0
_R1 = _R0 + _KAUG                     # wbr rows [0, 8)
_R2 = _R1 + _XALL                     # w1  rows [8, 264)
_R3 = _R2 + _H1W                      # w2  rows [264, 392)


def _make_kernel(out_pad):
    """Build the whole-model kernel for a given (static) padded output width."""

    def kernel(x_ref, w_ref, o_ref):
        # x_ref : (B, 8)        [D, F, I, 1, 0, 0, 0, 0]
        # w_ref : (392, >=256)  packed weight slab (wbr / w1 / w2 blocks)
        # o_ref : (B, out_pad)
        # Stage 1: all active branches + biases + ReLU in one MXU dot.
        x_all = jnp.maximum(
            jnp.dot(x_ref[...], w_ref[_R0:_R1, 0:_XALL],
                    preferred_element_type=jnp.float32), 0.0)        # (B, 256)
        # Stage 2: fc1 (+ bias via the ones column at lane 192) + ReLU.
        h1 = jnp.maximum(
            jnp.dot(x_all, w_ref[_R1:_R2, 0:_H1W],
                    preferred_element_type=jnp.float32), 0.0)        # (B, 128)
        # Stage 3: fc2 (+ bias via the ones column at lane 64); lane-dense out.
        o_ref[...] = jnp.dot(h1, w_ref[_R2:_R3, 0:out_pad],
                             preferred_element_type=jnp.float32)     # (B, out_pad)

    return kernel


def init_params(key, output_dim):
    """Deterministic synthetic parameters matching MLPModel66.__init__ shapes."""
    keys = jax.random.split(key, 16)
    branch_w, branch_b = [], []
    for i in range(6):  # 6x Linear(1, 64): weight (64, 1), bias (64,)
        branch_w.append(jax.random.normal(keys[2 * i], (64, 1), jnp.float32) * 0.5)
        branch_b.append(jax.random.normal(keys[2 * i + 1], (64,), jnp.float32) * 0.1)
    w1 = jax.random.normal(keys[12], (64, 384), jnp.float32) * 0.05   # fc1
    b1 = jax.random.normal(keys[13], (64,), jnp.float32) * 0.1
    w2 = jax.random.normal(keys[14], (output_dim, 64), jnp.float32) * 0.1  # fc2
    b2 = jax.random.normal(keys[15], (output_dim,), jnp.float32) * 0.1
    return {"branch_w": branch_w, "branch_b": branch_b,
            "w1": w1, "b1": b1, "w2": w2, "b2": b2}


def pack_params(params, output_dim):
    """One-time wrapper-side packing: prune dead branches, fold biases via
    ones-passthrough columns, fuse everything into a single lane-padded slab.

    Returns (slab (392, width) f32, out_pad)."""
    f32 = jnp.float32
    out_pad = ((output_dim + 127) // 128) * 128
    width = max(_XALL, out_pad)

    # --- Block 0: branch stage wbr (8, width).
    #     rows 0..2 = D/F/I weights (block-diagonal over 3x64 lanes),
    #     row 3     = branch biases (cols 0:192) + ones passthrough (col 192),
    #     rows 4..7 = 0 (matched by the zero columns of x_aug).
    wbr = jnp.zeros((_KAUG, width), f32)
    for j, i in enumerate(_ACTIVE_BLOCKS):
        w = params["branch_w"][i].reshape(_HID).astype(f32)            # (64,)
        wbr = wbr.at[j, _HID * j:_HID * (j + 1)].set(w)
    b_row = jnp.concatenate(
        [params["branch_b"][i].astype(f32) for i in _ACTIVE_BLOCKS])   # (192,)
    wbr = wbr.at[3, 0:_KACT].set(b_row)
    wbr = wbr.at[3, _KACT].set(1.0)          # x_all[:, 192] == 1 after ReLU

    # --- Block 1: fc1 stage w1 (256, width).
    #     rows 0:192 = fc1.weight.T restricted to the active input features,
    #     row 192    = fc1.bias (picked up by the ones column of x_all) and a
    #                  1.0 at col 64 so h1[:, 64] == 1 (passthrough for fc2 bias).
    w1t = params["w1"].T.astype(f32)                                   # (384, 64)
    w1_act = jnp.concatenate(
        [w1t[_HID * i:_HID * (i + 1)] for i in _ACTIVE_BLOCKS], axis=0)  # (192, 64)
    w1blk = jnp.zeros((_XALL, width), f32)
    w1blk = w1blk.at[0:_KACT, 0:_HID].set(w1_act)
    w1blk = w1blk.at[_KACT, 0:_HID].set(params["b1"].astype(f32))
    w1blk = w1blk.at[_KACT, _HID].set(1.0)   # h1[:, 64] == 1 after ReLU

    # --- Block 2: fc2 stage w2 (128, width).
    #     rows 0:64 = fc2.weight.T (lane-padded), row 64 = fc2.bias.
    w2t = params["w2"].T.astype(f32)                                   # (64, OUT)
    w2blk = jnp.zeros((_H1W, width), f32)
    w2blk = w2blk.at[0:_HID, 0:output_dim].set(w2t)
    w2blk = w2blk.at[_HID, 0:output_dim].set(params["b2"].astype(f32))

    slab = jnp.concatenate([wbr, w1blk, w2blk], axis=0)                # (392, width)
    return slab, out_pad


@functools.partial(jax.jit, static_argnames=("output_dim",))
def _forward_jit(slab, D, F, I, *, output_dim):
    """Jitted per-call data path: build x_aug, one pallas_call, final slice."""
    batch = D.shape[0]
    out_pad = ((output_dim + 127) // 128) * 128

    # x_aug = [D, F, I, 1, 0, 0, 0, 0]; the ones column folds the branch biases.
    ones = jnp.ones((batch, 1), jnp.float32)
    zeros = jnp.zeros((batch, _KAUG - 4), jnp.float32)
    x_aug = jnp.concatenate(
        [D.astype(jnp.float32), F.astype(jnp.float32), I.astype(jnp.float32),
         ones, zeros], axis=1)                                          # (B, 8)

    flops = 2 * batch * (_KAUG * _XALL + _XALL * _H1W + _H1W * out_pad)
    bytes_accessed = 4 * (x_aug.size + slab.size + batch * out_pad)

    vmem = pl.BlockSpec(memory_space=pltpu.MemorySpace.VMEM)
    out_padded = pl.pallas_call(
        _make_kernel(out_pad),
        out_shape=jax.ShapeDtypeStruct((batch, out_pad), jnp.float32),
        in_specs=[vmem, vmem],
        out_specs=vmem,
        cost_estimate=pl.CostEstimate(
            flops=flops, transcendentals=0, bytes_accessed=bytes_accessed),
    )(x_aug, slab)

    return out_padded[:, :output_dim]


class MLP66Pallas:
    """Packs parameters once; per call only the jitted kernel path runs.

    A, B, C are unused by the model; E, G, H feed branches whose outputs are
    multiplied by 0 in the forward, so they are pruned exactly."""

    def __init__(self, params, output_dim):
        self.output_dim = int(output_dim)
        self.slab, self.out_pad = pack_params(params, self.output_dim)

    def __call__(self, A, B, C, D, E, F, G, H, I):
        del A, B, C, E, G, H
        return _forward_jit(self.slab, D, F, I, output_dim=self.output_dim)


def _reference_forward(params, D, E, F, G, H, I):
    """Pure-JAX reference mirroring the PyTorch forward exactly (all 6 branches
    computed, E/G/H zero-masked)."""
    def branch(v, w, b):
        return jax.nn.relu(v @ w.T + b)
    hs = [branch(v, params["branch_w"][i], params["branch_b"][i])
          for i, v in enumerate([D, E, F, G, H, I])]
    x_all = jnp.concatenate(
        [hs[0], hs[1] * 0, hs[2], hs[3] * 0, hs[4] * 0, hs[5]], axis=1)
    h1 = jax.nn.relu(x_all @ params["w1"].T + params["b1"])
    return h1 @ params["w2"].T + params["b2"]


if __name__ == "__main__":
    key = jax.random.PRNGKey(0)
    batch = 8
    output_dim = 8

    pkey, dkey = jax.random.split(key)
    params = init_params(pkey, output_dim)

    # Nine scalar-feature inputs, each (batch, 1); A, B, C are unused.
    ikeys = jax.random.split(dkey, 9)
    A, B, C, D, E, F, G, H, I = (
        jax.random.normal(k, (batch, 1), jnp.float32) for k in ikeys
    )

    model = MLP66Pallas(params, output_dim)       # one-time packing
    out = model(A, B, C, D, E, F, G, H, I)        # jitted kernel path
    out = jax.block_until_ready(out)

    ref = _reference_forward(params, D, E, F, G, H, I)
    assert out.shape == (batch, output_dim)
    assert jnp.allclose(out, ref, atol=1e-3, rtol=1e-3), "mismatch vs reference"

    print("KERNEL_OK")
</pallas_src>

<mosaic_0001>
module attributes {stable_mosaic.version = 11 : i64} {
  func.func @kernel(%arg0: memref<8x8xf32, #tpu.memory_space<vmem>>, %arg1: memref<392x256xf32, #tpu.memory_space<vmem>>, %arg2: memref<8x128xf32, #tpu.memory_space<vmem>>) attributes {dimension_semantics = [], scalar_prefetch = 0 : i64, scratch_operands = 0 : i64, tpu.core_type = #tpu.core_type<tc>} {
    %c0 = arith.constant 0 : index
    %c0_0 = arith.constant 0 : index
    %0 = vector.load %arg0[%c0, %c0_0] : memref<8x8xf32, #tpu.memory_space<vmem>>, vector<8x8xf32>
    %c0_1 = arith.constant 0 : index
    %c0_2 = arith.constant 0 : index
    %1 = vector.load %arg1[%c0_1, %c0_2] : memref<392x256xf32, #tpu.memory_space<vmem>>, vector<8x256xf32>
    %cst = arith.constant dense<0.000000e+00> : vector<8x256xf32>
    %2 = tpu.matmul %0, %1, %cst {dimension_numbers = #tpu.dot_dimension_numbers<[1], [0], [0], [1], [0, 0, 1, 1], [], []>} : vector<8x8xf32>, vector<8x256xf32>, vector<8x256xf32> -> vector<8x256xf32>
    %cst_3 = arith.constant 0.000000e+00 : f32
    %3 = vector.broadcast %cst_3 : f32 to vector<8x256xf32>
    %4 = arith.maximumf %2, %3 : vector<8x256xf32>
    %c8 = arith.constant 8 : index
    %c0_4 = arith.constant 0 : index
    %5 = vector.load %arg1[%c8, %c0_4] : memref<392x256xf32, #tpu.memory_space<vmem>>, vector<256x128xf32>
    %cst_5 = arith.constant dense<0.000000e+00> : vector<8x128xf32>
    %6 = tpu.matmul %4, %5, %cst_5 {dimension_numbers = #tpu.dot_dimension_numbers<[1], [0], [0], [1], [0, 0, 1, 1], [], []>} : vector<8x256xf32>, vector<256x128xf32>, vector<8x128xf32> -> vector<8x128xf32>
    %cst_6 = arith.constant 0.000000e+00 : f32
    %7 = vector.broadcast %cst_6 : f32 to vector<8x128xf32>
    %8 = arith.maximumf %6, %7 : vector<8x128xf32>
    %c264 = arith.constant 264 : index
    %c0_7 = arith.constant 0 : index
    %9 = vector.load %arg1[%c264, %c0_7] : memref<392x256xf32, #tpu.memory_space<vmem>>, vector<128x128xf32>
    %cst_8 = arith.constant dense<0.000000e+00> : vector<8x128xf32>
    %10 = tpu.matmul %8, %9, %cst_8 {dimension_numbers = #tpu.dot_dimension_numbers<[1], [0], [0], [1], [0, 0, 1, 1], [], []>} : vector<8x128xf32>, vector<128x128xf32>, vector<8x128xf32> -> vector<8x128xf32>
    %c0_9 = arith.constant 0 : index
    %c0_10 = arith.constant 0 : index
    %11 = vector.load %arg2[%c0_9, %c0_10] : memref<8x128xf32, #tpu.memory_space<vmem>>, vector<8x128xf32>
    tpu.vector_store %arg2[%c0_9, %c0_10], %10 {strides = array<i32>} : memref<8x128xf32, #tpu.memory_space<vmem>>, vector<8x128xf32>,
    return
  }
}

</mosaic_0001>

<llo_original>
// kernel: _forward_jit.1
$region0: #{_forward_jit.1}
  #allocation0 [shape = 'u32[]', space=smem, size = 0x4, offset = 0x4, fixed_abs, tag = 'smem constant byte address 0x4 - core index']
  #allocation1 [shape = 'u32[144,128]{1,0:T(1,128)}', space=vmem, size = 0x12000, scoped, tag = 'internal scratch']
  %s0 = inlined_call_operand.vmem [shape: f32[8,8], index: 0, kind: input, shape index: {}]
  %s1 = inlined_call_operand.hbm [shape: f32[392,256], index: 1, kind: input, shape index: {}]
  %s2 = inlined_call_operand.hbm [shape: f32[8,128], index: 2, kind: output, shape index: {}]
  %s3 = sld [smem:[#allocation0]]
  $region22: #{_forward_jit.1} parent=0
    _
  %s5 = ssub.s32 1, %s3
  %s6 = scalar_select 0, %s5, %s3
  $region1: #{_forward_jit.1} parent=0
    #allocation2 [shape = 'u8[401408]{0}', space=vmem, size = 0x62000, scoped, tag = 'input window, operand 1, single buffered']
    #allocation3 [shape = 's32[1]{0}', space=sflag, size = 0x4, scoped, tag = 'scoped memory for _forward_jit.1']
    #allocation4 [shape = 's32[1]{0}', space=sflag, size = 0x4, scoped, tag = 'scoped memory for _forward_jit.1']
    #allocation5 [shape = 'u8[4096]{0}', space=vmem, size = 0x1000, scoped, tag = 'output window, operand 0, single buffered']
    %7 = vsyncpa [#allocation3], 0
    %8 = vsyncpa [#allocation4], 0
    // Predicated region
    $region2: #{_forward_jit.1} parent=1 // pred_check
      _
    $region3: #{_forward_jit.1} parent=1 // pred_check_branch
      %10 = sbr.rel (0) target = $region5
    $region4: #{_forward_jit.1} parent=1 // pred_region
      _
    $region5: #{_forward_jit.1} parent=1 // pred_fallthru
      _
    // Predicated region
    $region6: #{_forward_jit.1} parent=1 // pred_check
      _
    $region7: #{_forward_jit.1} parent=1 // pred_check_branch
      %12 = sbr.rel (0) target = $region9
    $region8: #{_forward_jit.1} parent=1 // pred_region
      %s14 = ssub.s32 12544, 12544
      %15 = vsyncadd [#allocation3], %s14
      %s16 = sshll.u32 [#allocation2], 4
      %s17 = int_to_ptr.vmem [resolvable:$true] %s16
      %22 = dma.hbm_to_vmem [thread:$0]  %s1, 12544, %s17, [#allocation3], 256, 256, 16
    $region9: #{_forward_jit.1} parent=1 // pred_fallthru
      _
    // Predicated region
    $region10: #{_forward_jit.1} parent=1 // pred_check
      _
    $region11: #{_forward_jit.1} parent=1 // pred_check_branch
      %24 = sbr.rel (0) target = $region13
    $region12: #{_forward_jit.1} parent=1 // pred_region
      %25 = dma.done [#allocation3], 12544
    $region13: #{_forward_jit.1} parent=1 // pred_fallthru
      _
    %v26 = vld [vmem:[%s0] sm:$0xff]
    %v27 = vld [vmem:[#allocation2] sm:$0xff]
    %v28 = vld [vmem:[#allocation2 + $0x8] sm:$0xff]
    %vm29 = vcmask 64512
    %v31 = vsel %vm29, %v26, 0
    %33 = vmatprep.subr.mxu0 0.0
    %34 = vmatpush1.msra.mxu0 0.0
    %35 = vmatprep.subr.mxu0 0.0
    %36 = vmatpush1.msra.mxu0 0.0
    %37 = vmatprep.subr.mxu0 0.0
    %38 = vmatpush1.msra.mxu0 0.0
    %39 = vmatprep.subr.mxu0 0.0
    %40 = vmatpush1.msra.mxu0 0.0
    %41 = vmatprep.subr.mxu0 0.0
    %42 = vmatpush1.msra.mxu0 0.0
    %43 = vmatprep.subr.mxu0 0.0
    %44 = vmatpush1.msra.mxu0 0.0
    %45 = vmatprep.subr.mxu0 0.0
    %46 = vmatpush1.msra.mxu0 0.0
    %47 = vmatprep.subr.mxu0 0.0
    %48 = vmatpush1.msra.mxu0 0.0
    %49 = vmatprep.subr.mxu0 0.0
    %50 = vmatpush1.msra.mxu0 0.0
    %51 = vmatprep.subr.mxu0 0.0
    %52 = vmatpush1.msra.mxu0 0.0
    %53 = vmatprep.subr.mxu0 0.0
    %54 = vmatpush1.msra.mxu0 0.0
    %55 = vmatprep.subr.mxu0 0.0
    %56 = vmatpush1.msra.mxu0 0.0
    %57 = vmatprep.subr.mxu0 0.0
    %58 = vmatpush1.msra.mxu0 0.0
    %59 = vmatprep.subr.mxu0 0.0
    %60 = vmatpush1.msra.mxu0 0.0
    %61 = vmatprep.subr.mxu0 0.0
    %62 = vmatpush1.msra.mxu0 0.0
    %63 = vmatprep.subr.mxu0 %v28
    %64 = vmatpush1.msra.mxu0 %v27
    %65 = vmatprep.subr.mxu0 0.0
    %66 = vmatpush2.msra.mxu0 0.0
    %67 = vmatprep.subr.mxu0 0.0
    %68 = vmatpush2.msra.mxu0 0.0
    %69 = vmatprep.subr.mxu0 0.0
    %70 = vmatpush2.msra.mxu0 0.0
    %71 = vmatprep.subr.mxu0 0.0
    %72 = vmatpush2.msra.mxu0 0.0
    %73 = vmatprep.subr.mxu0 0.0
    %74 = vmatpush2.msra.mxu0 0.0
    %75 = vmatprep.subr.mxu0 0.0
    %76 = vmatpush2.msra.mxu0 0.0
    %77 = vmatprep.subr.mxu0 0.0
    %78 = vmatpush2.msra.mxu0 0.0
    %79 = vmatprep.subr.mxu0 0.0
    %80 = vmatpush2.msra.mxu0 0.0
    %81 = vmatprep.subr.mxu0 0.0
    %82 = vmatpush2.msra.mxu0 0.0
    %83 = vmatprep.subr.mxu0 0.0
    %84 = vmatpush2.msra.mxu0 0.0
    %85 = vmatprep.subr.mxu0 0.0
    %86 = vmatpush2.msra.mxu0 0.0
    %87 = vmatprep.subr.mxu0 0.0
    %88 = vmatpush2.msra.mxu0 0.0
    %89 = vmatprep.subr.mxu0 0.0
    %90 = vmatpush2.msra.mxu0 0.0
    %91 = vmatprep.subr.mxu0 0.0
    %92 = vmatpush2.msra.mxu0 0.0
    %93 = vmatprep.subr.mxu0 0.0
    %94 = vmatpush2.msra.mxu0 0.0
    %95 = vmatprep.subr.mxu0 0.0
    %96 = vmatpush2.msra.mxu0 0.0
    %97 = vmatprep.mubr.f32.mxu0 0.0
    %98 = vmatmul.mubr.f32.gmra.mxu0 %v31
    %v99 = vpop.f32.mrf.mxu0
    %v100 = vadd.f32 0.0, %v99
    %v101 = vpop.f32.mrf.mxu0
    %v102 = vadd.f32 0.0, %v101
    %103 = vdwg.mxu0
    %v104 = vmax.f32 %v100, 0.0
    %v105 = vmax.f32 %v102, 0.0
    %v106 = vld [vmem:[#allocation2 + $0x10] sm:$0xff]
    %v107 = vld [vmem:[#allocation2 + $0x20] sm:$0xff]
    %v108 = vld [vmem:[#allocation2 + $0x30] sm:$0xff]
    %v109 = vld [vmem:[#allocation2 + $0x40] sm:$0xff]
    %v110 = vld [vmem:[#allocation2 + $0x50] sm:$0xff]
    %v111 = vld [vmem:[#allocation2 + $0x60] sm:$0xff]
    %v112 = vld [vmem:[#allocation2 + $0x70] sm:$0xff]
    %v113 = vld [vmem:[#allocation2 + $0x80] sm:$0xff]
    %v114 = vld [vmem:[#allocation2 + $0x90] sm:$0xff]
    %v115 = vld [vmem:[#allocation2 + $0xa0] sm:$0xff]
    %v116 = vld [vmem:[#allocation2 + $0xb0] sm:$0xff]
    %v117 = vld [vmem:[#allocation2 + $0xc0] sm:$0xff]
    %v118 = vld [vmem:[#allocation2 + $0xd0] sm:$0xff]
    %v119 = vld [vmem:[#allocation2 + $0xe0] sm:$0xff]
    %v120 = vld [vmem:[#allocation2 + $0xf0] sm:$0xff]
    %v121 = vld [vmem:[#allocation2 + $0x100] sm:$0xff]
    %v122 = vld [vmem:[#allocation2 + $0x110] sm:$0xff]
    %v123 = vld [vmem:[#allocation2 + $0x120] sm:$0xff]
    %v124 = vld [vmem:[#allocation2 + $0x130] sm:$0xff]
    %v125 = vld [vmem:[#allocation2 + $0x140] sm:$0xff]
    %v126 = vld [vmem:[#allocation2 + $0x150] sm:$0xff]
    %v127 = vld [vmem:[#allocation2 + $0x160] sm:$0xff]
    %v128 = vld [vmem:[#allocation2 + $0x170] sm:$0xff]
    %v129 = vld [vmem:[#allocation2 + $0x180] sm:$0xff]
    %v130 = vld [vmem:[#allocation2 + $0x190] sm:$0xff]
    %v131 = vld [vmem:[#allocation2 + $0x1a0] sm:$0xff]
    %v132 = vld [vmem:[#allocation2 + $0x1b0] sm:$0xff]
    %v133 = vld [vmem:[#allocation2 + $0x1c0] sm:$0xff]
    %v134 = vld [vmem:[#allocation2 + $0x1d0] sm:$0xff]
    %v135 = vld [vmem:[#allocation2 + $0x1e0] sm:$0xff]
    %v136 = vld [vmem:[#allocation2 + $0x1f0] sm:$0xff]
    %v137 = vld [vmem:[#allocation2 + $0x200] sm:$0xff]
    %138 = vmatprep.subr.mxu0 0.0
    %139 = vmatpush1.msra.mxu0 %v121
    %140 = vmatprep.subr.mxu0 0.0
    %141 = vmatpush1.msra.mxu0 %v120
    %142 = vmatprep.subr.mxu0 0.0
    %143 = vmatpush1.msra.mxu0 %v119
    %144 = vmatprep.subr.mxu0 0.0
    %145 = vmatpush1.msra.mxu0 %v118
    %146 = vmatprep.subr.mxu0 0.0
    %147 = vmatpush1.msra.mxu0 %v117
    %148 = vmatprep.subr.mxu0 0.0
    %149 = vmatpush1.msra.mxu0 %v116
    %150 = vmatprep.subr.mxu0 0.0
    %151 = vmatpush1.msra.mxu0 %v115
    %152 = vmatprep.subr.mxu0 0.0
    %153 = vmatpush1.msra.mxu0 %v114
    %154 = vmatprep.subr.mxu0 0.0
    %155 = vmatpush1.msra.mxu0 %v113
    %156 = vmatprep.subr.mxu0 0.0
    %157 = vmatpush1.msra.mxu0 %v112
    %158 = vmatprep.subr.mxu0 0.0
    %159 = vmatpush1.msra.mxu0 %v111
    %160 = vmatprep.subr.mxu0 0.0
    %161 = vmatpush1.msra.mxu0 %v110
    %162 = vmatprep.subr.mxu0 0.0
    %163 = vmatpush1.msra.mxu0 %v109
    %164 = vmatprep.subr.mxu0 0.0
    %165 = vmatpush1.msra.mxu0 %v108
    %166 = vmatprep.subr.mxu0 0.0
    %167 = vmatpush1.msra.mxu0 %v107
    %168 = vmatprep.subr.mxu0 0.0
    %169 = vmatpush1.msra.mxu0 %v106
    %170 = vmatprep.subr.mxu0 0.0
    %171 = vmatpush2.msra.mxu0 %v137
    %172 = vmatprep.subr.mxu0 0.0
    %173 = vmatpush2.msra.mxu0 %v136
    %174 = vmatprep.subr.mxu0 0.0
    %175 = vmatpush2.msra.mxu0 %v135
    %176 = vmatprep.subr.mxu0 0.0
    %177 = vmatpush2.msra.mxu0 %v134
    %178 = vmatprep.subr.mxu0 0.0
    %179 = vmatpush2.msra.mxu0 %v133
    %180 = vmatprep.subr.mxu0 0.0
    %181 = vmatpush2.msra.mxu0 %v132
    %182 = vmatprep.subr.mxu0 0.0
    %183 = vmatpush2.msra.mxu0 %v131
    %184 = vmatprep.subr.mxu0 0.0
    %185 = vmatpush2.msra.mxu0 %v130
    %186 = vmatprep.subr.mxu0 0.0
    %187 = vmatpush2.msra.mxu0 %v129
    %188 = vmatprep.subr.mxu0 0.0
    %189 = vmatpush2.msra.mxu0 %v128
    %190 = vmatprep.subr.mxu0 0.0
    %191 = vmatpush2.msra.mxu0 %v127
    %192 = vmatprep.subr.mxu0 0.0
    %193 = vmatpush2.msra.mxu0 %v126
    %194 = vmatprep.subr.mxu0 0.0
    %195 = vmatpush2.msra.mxu0 %v125
    %196 = vmatprep.subr.mxu0 0.0
    %197 = vmatpush2.msra.mxu0 %v124
    %198 = vmatprep.subr.mxu0 0.0
    %199 = vmatpush2.msra.mxu0 %v123
    %200 = vmatprep.subr.mxu0 0.0
    %201 = vmatpush2.msra.mxu0 %v122
    %202 = vmatprep.mubr.f32.mxu0 %v105
    %203 = vmatmul.mubr.f32.gmra.mxu0 %v104
    %v204 = vpop.f32.mrf.mxu0
    %v205 = vadd.f32 0.0, %v204
    %v206 = vpop.f32.mrf.mxu0
    %207 = vdwg.mxu0
    %v208 = vmax.f32 %v205, 0.0
    %v209 = vld [vmem:[#allocation2 + $0x210] sm:$0xff]
    %v210 = vld [vmem:[#allocation2 + $0x220] sm:$0xff]
    %v211 = vld [vmem:[#allocation2 + $0x230] sm:$0xff]
    %v212 = vld [vmem:[#allocation2 + $0x240] sm:$0xff]
    %v213 = vld [vmem:[#allocation2 + $0x250] sm:$0xff]
    %v214 = vld [vmem:[#allocation2 + $0x260] sm:$0xff]
    %v215 = vld [vmem:[#allocation2 + $0x270] sm:$0xff]
    %v216 = vld [vmem:[#allocation2 + $0x280] sm:$0xff]
    %v217 = vld [vmem:[#allocation2 + $0x290] sm:$0xff]
    %v218 = vld [vmem:[#allocation2 + $0x2a0] sm:$0xff]
    %v219 = vld [vmem:[#allocation2 + $0x2b0] sm:$0xff]
    %v220 = vld [vmem:[#allocation2 + $0x2c0] sm:$0xff]
    %v221 = vld [vmem:[#allocation2 + $0x2d0] sm:$0xff]
    %v222 = vld [vmem:[#allocation2 + $0x2e0] sm:$0xff]
    %v223 = vld [vmem:[#allocation2 + $0x2f0] sm:$0xff]
    %v224 = vld [vmem:[#allocation2 + $0x300] sm:$0xff]
    %225 = vmatprep.subr.mxu0 0.0
    %226 = vmatpush1.msra.mxu0 %v224
    %227 = vmatprep.subr.mxu0 0.0
    %228 = vmatpush1.msra.mxu0 %v223
    %229 = vmatprep.subr.mxu0 0.0
    %230 = vmatpush1.msra.mxu0 %v222
    %231 = vmatprep.subr.mxu0 0.0
    %232 = vmatpush1.msra.mxu0 %v221
    %233 = vmatprep.subr.mxu0 0.0
    %234 = vmatpush1.msra.mxu0 %v220
    %235 = vmatprep.subr.mxu0 0.0
    %236 = vmatpush1.msra.mxu0 %v219
    %237 = vmatprep.subr.mxu0 0.0
    %238 = vmatpush1.msra.mxu0 %v218
    %239 = vmatprep.subr.mxu0 0.0
    %240 = vmatpush1.msra.mxu0 %v217
    %241 = vmatprep.subr.mxu0 0.0
    %242 = vmatpush1.msra.mxu0 %v216
    %243 = vmatprep.subr.mxu0 0.0
    %244 = vmatpush1.msra.mxu0 %v215
    %245 = vmatprep.subr.mxu0 0.0
    %246 = vmatpush1.msra.mxu0 %v214
    %247 = vmatprep.subr.mxu0 0.0
    %248 = vmatpush1.msra.mxu0 %v213
    %249 = vmatprep.subr.mxu0 0.0
    %250 = vmatpush1.msra.mxu0 %v212
    %251 = vmatprep.subr.mxu0 0.0
    %252 = vmatpush1.msra.mxu0 %v211
    %253 = vmatprep.subr.mxu0 0.0
    %254 = vmatpush1.msra.mxu0 %v210
    %255 = vmatprep.subr.mxu0 0.0
    %256 = vmatpush1.msra.mxu0 %v209
    %257 = vmatprep.subr.mxu0 0.0
    %258 = vmatpush2.msra.mxu0 0.0
    %259 = vmatprep.subr.mxu0 0.0
    %260 = vmatpush2.msra.mxu0 0.0
    %261 = vmatprep.subr.mxu0 0.0
    %262 = vmatpush2.msra.mxu0 0.0
    %263 = vmatprep.subr.mxu0 0.0
    %264 = vmatpush2.msra.mxu0 0.0
    %265 = vmatprep.subr.mxu0 0.0
    %266 = vmatpush2.msra.mxu0 0.0
    %267 = vmatprep.subr.mxu0 0.0
    %268 = vmatpush2.msra.mxu0 0.0
    %269 = vmatprep.subr.mxu0 0.0
    %270 = vmatpush2.msra.mxu0 0.0
    %271 = vmatprep.subr.mxu0 0.0
    %272 = vmatpush2.msra.mxu0 0.0
    %273 = vmatprep.subr.mxu0 0.0
    %274 = vmatpush2.msra.mxu0 0.0
    %275 = vmatprep.subr.mxu0 0.0
    %276 = vmatpush2.msra.mxu0 0.0
    %277 = vmatprep.subr.mxu0 0.0
    %278 = vmatpush2.msra.mxu0 0.0
    %279 = vmatprep.subr.mxu0 0.0
    %280 = vmatpush2.msra.mxu0 0.0
    %281 = vmatprep.subr.mxu0 0.0
    %282 = vmatpush2.msra.mxu0 0.0
    %283 = vmatprep.subr.mxu0 0.0
    %284 = vmatpush2.msra.mxu0 0.0
    %285 = vmatprep.subr.mxu0 0.0
    %286 = vmatpush2.msra.mxu0 0.0
    %287 = vmatprep.subr.mxu0 0.0
    %288 = vmatpush2.msra.mxu0 0.0
    %289 = vmatprep.mubr.f32.mxu0 0.0
    %290 = vmatmul.mubr.f32.gmra.mxu0 %v208
    %v291 = vpop.f32.mrf.mxu0
    %v292 = vadd.f32 0.0, %v291
    %v293 = vpop.f32.mrf.mxu0
    %294 = vdwg.mxu0
    %295 = vst [vmem:[#allocation5] sm:$0xff] %v292
    // Predicated region
    $region14: #{_forward_jit.1} parent=1 // pred_check
      _
    $region15: #{_forward_jit.1} parent=1 // pred_check_branch
      %297 = sbr.rel (0) target = $region17
    $region16: #{_forward_jit.1} parent=1 // pred_region
      %s299 = ssub.s32 128, 128
      %300 = vsyncadd [#allocation4], %s299
      %s302 = sshll.u32 [#allocation5], 4
      %s303 = int_to_ptr.vmem [resolvable:$true] %s302
      %305 = dma.vmem_to_hbm [thread:$0]  %s303, 128, %s2, [#allocation4]
    $region17: #{_forward_jit.1} parent=1 // pred_fallthru
      _
    // Predicated region
    $region18: #{_forward_jit.1} parent=1 // pred_check
      _
    $region19: #{_forward_jit.1} parent=1 // pred_check_branch
      %307 = sbr.rel (0) target = $region21
    $region20: #{_forward_jit.1} parent=1 // pred_region
      %308 = dma.done [#allocation4], 128
    $region21: #{_forward_jit.1} parent=1 // pred_fallthru
      _
    %309 = vsyncpa [#allocation3], 1
    %310 = vsyncpa [#allocation4], 1

</llo_original>
